<compile_context>
chip_gen: v7x
topology: tpu7x:2x2x1
jax: 0.10.0
libtpu: 0.0.40
codegen_flags: <defaults>
</compile_context>

<pallas_src>
import jax
import jax.numpy as jnp
from jax.experimental import pallas as pl
from jax.experimental.pallas import tpu as pltpu


# ---------------------------------------------------------------------------
# Pallas kernel: fused embedding lookup + mask + fused-linear head + sigmoid.
# Single invocation (no grid); all operands VMEM/SMEM resident.
# ---------------------------------------------------------------------------
def _make_head_kernel(B, S, V, B_pad):
    def head_kernel(ids_t_ref, mask_t_ref, emb_t_ref, w_ref, b_ref, o_ref):
        # ids_t_ref  : (S, B)     int32 VMEM  -- input_ids^T
        # mask_t_ref : (S, B)     int32 VMEM  -- attention_mask^T
        # emb_t_ref  : (E, V)     f32   VMEM  -- embedding table^T (VMEM-resident)
        # w_ref      : (S, E)     f32   VMEM  -- fused weight (w1 @ w2)
        # b_ref      : (1, 1)     f32   SMEM  -- fused bias  (b1 @ w2 + b2)
        # o_ref      : (1, B_pad) f32   VMEM  -- sigmoid(logits), lane-dense

        # One MXU matmul contracts the fused weight against EVERY vocab row:
        # scores[s, v] = dot(w_fused[s, :], embed_table[v, :]).
        scores = jnp.dot(w_ref[...], emb_t_ref[...],
                         preferred_element_type=jnp.float32)          # (S, V)

        ids_t = ids_t_ref[...]                                         # (S, B)
        mask_t = mask_t_ref[...].astype(jnp.float32)                   # (S, B)
        vocab_lane = jax.lax.broadcasted_iota(jnp.int32, (S, V), 1)    # (S, V)
        out_lane = jax.lax.broadcasted_iota(jnp.int32, (1, B_pad), 1)  # (1, B_pad)

        out = jnp.zeros((1, B_pad), jnp.float32)
        for b in range(B):   # static unroll; production: batch-tile grid axis
            ids_col = ids_t[:, b:b + 1]                                # (S, 1)
            mask_col = mask_t[:, b:b + 1]                              # (S, 1)
            # One-hot select of scores[s, ids[b, s]]  (VPU compare/select),
            # then the masked sequence reduction (XLU lane + sublane reduce).
            picked = jnp.where(vocab_lane == ids_col, scores, 0.0)     # (S, V)
            per_pos = jnp.sum(picked, axis=1, keepdims=True)           # (S, 1)
            logit = jnp.sum(per_pos * mask_col, axis=0, keepdims=True) # (1, 1)
            prob = jax.nn.sigmoid(logit + b_ref[0, 0])                 # EUP
            out = jnp.where(out_lane == b, prob, out)                  # lane b
        o_ref[...] = out            # single lane-dense (1, B_pad) store
    return head_kernel


# ---------------------------------------------------------------------------
# One-time parameter fusion (hoisted out of the per-call forward path).
# Linear(S*E, H) -> Linear(H, 1) with no nonlinearity between them is exactly
#   x @ (w1 @ w2) + (b1 @ w2 + b2).
# ---------------------------------------------------------------------------
def fuse_params(params):
    embed_table = params["embed_table"]                       # (V, E)
    _, E = embed_table.shape
    S = params["w1"].shape[0] // E
    w_fused = (params["w1"] @ params["w2"]).reshape(S, E)     # (S, E)
    b_fused = params["b1"] @ params["w2"] + params["b2"]      # (1, 1)
    return {
        "emb_t": jnp.asarray(embed_table.T, jnp.float32),     # (E, V)
        "w": jnp.asarray(w_fused, jnp.float32),                # (S, E)
        "b": jnp.asarray(b_fused, jnp.float32),                # (1, 1)
    }


def classifier_head_fused(fused, input_ids, attention_mask):
    B, S = input_ids.shape
    E, V = fused["emb_t"].shape
    B_pad = ((B + 127) // 128) * 128        # lane-dense logit slab (>=128 lanes)

    kernel = _make_head_kernel(B, S, V, B_pad)

    out = pl.pallas_call(
        kernel,
        out_shape=jax.ShapeDtypeStruct((1, B_pad), jnp.float32),
        in_specs=[
            pl.BlockSpec(memory_space=pltpu.MemorySpace.VMEM),   # input_ids^T
            pl.BlockSpec(memory_space=pltpu.MemorySpace.VMEM),   # attention_mask^T
            pl.BlockSpec(memory_space=pltpu.MemorySpace.VMEM),   # embed_table^T
            pl.BlockSpec(memory_space=pltpu.MemorySpace.VMEM),   # fused weight
            pl.BlockSpec(memory_space=pltpu.MemorySpace.SMEM),   # fused bias (scalar)
        ],
        out_specs=pl.BlockSpec(memory_space=pltpu.MemorySpace.VMEM),
    )(
        input_ids.T.astype(jnp.int32),
        attention_mask.T.astype(jnp.int32),
        fused["emb_t"], fused["w"], fused["b"],
    )
    return out[0, :B].reshape(B, 1)


def simple_classifier_forward(fused_params, input_ids, attention_mask):
    # TODO(synk): frozen pretrained BERT backbone (needs its checkpoint) is
    # replaced by a deterministic masked embedding lookup standing in for
    # hidden_states[-1]; that stand-in is fused into the Pallas kernel.
    return classifier_head_fused(fused_params, input_ids, attention_mask)


def init_params(key, vocab_size, seq_length, embedding_size, hidden_size):
    k0, k1, k2, k3, k4 = jax.random.split(key, 5)
    in1 = seq_length * embedding_size
    bound1 = 1.0 / jnp.sqrt(in1)
    bound2 = 1.0 / jnp.sqrt(hidden_size)
    return {
        "embed_table": jax.random.normal(
            k0, (vocab_size, embedding_size), jnp.float32) * 0.02,
        # PyTorch nn.Linear init: U(-1/sqrt(fan_in), 1/sqrt(fan_in)).
        # Stored as (in, out) so the head computes x @ W + b.
        "w1": jax.random.uniform(k1, (in1, hidden_size), jnp.float32,
                                 -bound1, bound1),
        "b1": jax.random.uniform(k2, (1, hidden_size), jnp.float32,
                                 -bound1, bound1),
        "w2": jax.random.uniform(k3, (hidden_size, 1), jnp.float32,
                                 -bound2, bound2),
        "b2": jax.random.uniform(k4, (1, 1), jnp.float32,
                                 -bound2, bound2),
    }


if __name__ == "__main__":
    # Small shapes consistent with the module's forward.
    B, S, E, H = 2, 8, 64, 32
    VOCAB = 128

    key = jax.random.PRNGKey(0)
    kp, ki = jax.random.split(key)
    params = init_params(kp, VOCAB, S, E, H)
    fused = fuse_params(params)          # hoisted: runs once, not per forward

    input_ids = jax.random.randint(ki, (B, S), 0, VOCAB, jnp.int32)
    attention_mask = jnp.ones((B, S), jnp.int32)

    forward = jax.jit(simple_classifier_forward)
    out = jax.block_until_ready(forward(fused, input_ids, attention_mask))

    # Pure-JAX reference using the ORIGINAL (unfused) two-Linear head and the
    # same synthetic backbone.  Fusion / re-association only reorders float
    # rounding, so a 1e-4 tolerance is ample.
    emb = (params["embed_table"][input_ids]
           * attention_mask[..., None].astype(jnp.float32))
    x_flat = emb.reshape(B, S * E)                        # nn.Flatten
    ref = jax.nn.sigmoid(
        (x_flat @ params["w1"] + params["b1"]) @ params["w2"] + params["b2"])

    assert out.shape == (B, 1)
    assert jnp.allclose(out, ref, atol=1e-4, rtol=1e-4), (out, ref)
    print("KERNEL_OK")
</pallas_src>

<mosaic_0001>
module attributes {stable_mosaic.version = 11 : i64} {
  func.func @head_kernel(%arg0: memref<8x2xi32, #tpu.memory_space<vmem>>, %arg1: memref<8x2xi32, #tpu.memory_space<vmem>>, %arg2: memref<64x128xf32, #tpu.memory_space<vmem>>, %arg3: memref<8x64xf32, #tpu.memory_space<vmem>>, %arg4: memref<1x1xf32, #tpu.memory_space<smem>>, %arg5: memref<1x128xf32, #tpu.memory_space<vmem>>) attributes {dimension_semantics = [], scalar_prefetch = 0 : i64, scratch_operands = 0 : i64, tpu.core_type = #tpu.core_type<tc>} {
    %c0 = arith.constant 0 : index
    %c0_0 = arith.constant 0 : index
    %0 = vector.load %arg3[%c0, %c0_0] : memref<8x64xf32, #tpu.memory_space<vmem>>, vector<8x64xf32>
    %c0_1 = arith.constant 0 : index
    %c0_2 = arith.constant 0 : index
    %1 = vector.load %arg2[%c0_1, %c0_2] : memref<64x128xf32, #tpu.memory_space<vmem>>, vector<64x128xf32>
    %cst = arith.constant dense<0.000000e+00> : vector<8x128xf32>
    %2 = tpu.matmul %0, %1, %cst {dimension_numbers = #tpu.dot_dimension_numbers<[1], [0], [0], [1], [0, 0, 1, 1], [], []>} : vector<8x64xf32>, vector<64x128xf32>, vector<8x128xf32> -> vector<8x128xf32>
    %c0_3 = arith.constant 0 : index
    %c0_4 = arith.constant 0 : index
    %3 = vector.load %arg0[%c0_3, %c0_4] : memref<8x2xi32, #tpu.memory_space<vmem>>, vector<8x2xi32>
    %c0_5 = arith.constant 0 : index
    %c0_6 = arith.constant 0 : index
    %4 = vector.load %arg1[%c0_5, %c0_6] : memref<8x2xi32, #tpu.memory_space<vmem>>, vector<8x2xi32>
    %5 = arith.sitofp %4 : vector<8x2xi32> to vector<8x2xf32>
    %6 = tpu.iota {dimensions = array<i32: 1>} : vector<8x128xi32>
    %7 = tpu.iota {dimensions = array<i32: 1>} : vector<1x128xi32>
    %cst_7 = arith.constant 0.000000e+00 : f32
    %8 = vector.broadcast %cst_7 : f32 to vector<1x128xf32>
    %9 = vector.extract_strided_slice %3 {offsets = [0, 0], sizes = [8, 1], strides = [1, 1]} : vector<8x2xi32> to vector<8x1xi32>
    %10 = vector.extract_strided_slice %5 {offsets = [0, 0], sizes = [8, 1], strides = [1, 1]} : vector<8x2xf32> to vector<8x1xf32>
    %11 = vector.broadcast %9 : vector<8x1xi32> to vector<8x128xi32>
    %12 = arith.cmpi eq, %6, %11 : vector<8x128xi32>
    %cst_8 = arith.constant 0.000000e+00 : f32
    %13 = vector.broadcast %cst_8 : f32 to vector<8x128xf32>
    %14 = arith.select %12, %2, %13 : vector<8x128xi1>, vector<8x128xf32>
    %cst_9 = arith.constant dense<0.000000e+00> : vector<8xf32>
    %15 = vector.multi_reduction <add>, %14, %cst_9 [1] : vector<8x128xf32> to vector<8xf32>
    %16 = vector.shape_cast %15 : vector<8xf32> to vector<8x1xf32>
    %17 = arith.mulf %16, %10 : vector<8x1xf32>
    %cst_10 = arith.constant dense<0.000000e+00> : vector<1xf32>
    %18 = vector.multi_reduction <add>, %17, %cst_10 [0] : vector<8x1xf32> to vector<1xf32>
    %19 = vector.shape_cast %18 : vector<1xf32> to vector<1x1xf32>
    %c0_11 = arith.constant 0 : index
    %c0_12 = arith.constant 0 : index
    %20 = memref.load %arg4[%c0_11, %c0_12] : memref<1x1xf32, #tpu.memory_space<smem>>
    %21 = vector.broadcast %20 : f32 to vector<1x1xf32>
    %22 = arith.addf %19, %21 : vector<1x1xf32>
    %23 = arith.negf %22 : vector<1x1xf32>
    %24 = math.exp %23 : vector<1x1xf32>
    %cst_13 = arith.constant 1.000000e+00 : f32
    %25 = vector.broadcast %cst_13 : f32 to vector<1x1xf32>
    %26 = arith.addf %25, %24 : vector<1x1xf32>
    %27 = arith.divf %25, %26 : vector<1x1xf32>
    %c0_i32 = arith.constant 0 : i32
    %28 = vector.broadcast %c0_i32 : i32 to vector<1x128xi32>
    %29 = arith.cmpi eq, %7, %28 : vector<1x128xi32>
    %30 = vector.shape_cast %27 : vector<1x1xf32> to vector<1x1xf32>
    %31 = vector.broadcast %30 : vector<1x1xf32> to vector<1x128xf32>
    %32 = arith.select %29, %31, %8 : vector<1x128xi1>, vector<1x128xf32>
    %33 = vector.extract_strided_slice %3 {offsets = [0, 1], sizes = [8, 1], strides = [1, 1]} : vector<8x2xi32> to vector<8x1xi32>
    %34 = vector.extract_strided_slice %5 {offsets = [0, 1], sizes = [8, 1], strides = [1, 1]} : vector<8x2xf32> to vector<8x1xf32>
    %35 = vector.broadcast %33 : vector<8x1xi32> to vector<8x128xi32>
    %36 = arith.cmpi eq, %6, %35 : vector<8x128xi32>
    %cst_14 = arith.constant 0.000000e+00 : f32
    %37 = vector.broadcast %cst_14 : f32 to vector<8x128xf32>
    %38 = arith.select %36, %2, %37 : vector<8x128xi1>, vector<8x128xf32>
    %cst_15 = arith.constant dense<0.000000e+00> : vector<8xf32>
    %39 = vector.multi_reduction <add>, %38, %cst_15 [1] : vector<8x128xf32> to vector<8xf32>
    %40 = vector.shape_cast %39 : vector<8xf32> to vector<8x1xf32>
    %41 = arith.mulf %40, %34 : vector<8x1xf32>
    %cst_16 = arith.constant dense<0.000000e+00> : vector<1xf32>
    %42 = vector.multi_reduction <add>, %41, %cst_16 [0] : vector<8x1xf32> to vector<1xf32>
    %43 = vector.shape_cast %42 : vector<1xf32> to vector<1x1xf32>
    %c0_17 = arith.constant 0 : index
    %c0_18 = arith.constant 0 : index
    %44 = memref.load %arg4[%c0_17, %c0_18] : memref<1x1xf32, #tpu.memory_space<smem>>
    %45 = vector.broadcast %44 : f32 to vector<1x1xf32>
    %46 = arith.addf %43, %45 : vector<1x1xf32>
    %47 = arith.negf %46 : vector<1x1xf32>
    %48 = math.exp %47 : vector<1x1xf32>
    %cst_19 = arith.constant 1.000000e+00 : f32
    %49 = vector.broadcast %cst_19 : f32 to vector<1x1xf32>
    %50 = arith.addf %49, %48 : vector<1x1xf32>
    %51 = arith.divf %49, %50 : vector<1x1xf32>
    %c1_i32 = arith.constant 1 : i32
    %52 = vector.broadcast %c1_i32 : i32 to vector<1x128xi32>
    %53 = arith.cmpi eq, %7, %52 : vector<1x128xi32>
    %54 = vector.shape_cast %51 : vector<1x1xf32> to vector<1x1xf32>
    %55 = vector.broadcast %54 : vector<1x1xf32> to vector<1x128xf32>
    %56 = arith.select %53, %55, %32 : vector<1x128xi1>, vector<1x128xf32>
    %c0_20 = arith.constant 0 : index
    %c0_21 = arith.constant 0 : index
    %57 = vector.load %arg5[%c0_20, %c0_21] : memref<1x128xf32, #tpu.memory_space<vmem>>, vector<1x128xf32>
    tpu.vector_store %arg5[%c0_20, %c0_21], %56 {strides = array<i32>} : memref<1x128xf32, #tpu.memory_space<vmem>>, vector<1x128xf32>,
    return
  }
}

</mosaic_0001>

<llo_original>
// kernel: simple_classifier_forward.1
$region0: #{simple_classifier_forward.1}
  #allocation0 [shape = 'u32[]', space=smem, size = 0x4, offset = 0x4, fixed_abs, tag = 'smem constant byte address 0x4 - core index']
  #allocation1 [shape = 'u32[144,128]{1,0:T(1,128)}', space=vmem, size = 0x12000, scoped, tag = 'internal scratch']
  #allocation2 [shape = 'f32[1,1]{1,0:T(1,128)S(6)}', space=smem, size = 0x200, scoped, tag = 'scoped memory for simple_classifier_forward.1']
  %s0 = inlined_call_operand.vmem [shape: s32[8,2], index: 0, kind: input, shape index: {}]
  %s1 = inlined_call_operand.vmem [shape: s32[8,2], index: 1, kind: input, shape index: {}]
  %s2 = inlined_call_operand.hbm [shape: f32[64,128], index: 2, kind: input, shape index: {}]
  %s3 = inlined_call_operand.vmem [shape: f32[8,64], index: 3, kind: input, shape index: {}]
  %s4 = inlined_call_operand.<no memory space> [shape: f32[1,1], index: 4, kind: input, shape index: {}]
  %s5 = inlined_call_operand.vmem [shape: f32[1,128], index: 5, kind: output, shape index: {}]
  %s6 = sld [smem:[#allocation0]]
  $region34: #{simple_classifier_forward.1} parent=0
    _
  %s8 = ssub.s32 1, %s6
  %s9 = scalar_select 0, %s8, %s6
  %10 = sst [smem:[#allocation2]] %s4
  $region1: #{simple_classifier_forward.1} parent=0
    #allocation3 [shape = 'u8[32768]{0}', space=vmem, size = 0x8000, scoped, tag = 'input window, operand 2, single buffered']
    #allocation4 [shape = 's32[1]{0}', space=sflag, size = 0x4, scoped, tag = 'scoped memory for simple_classifier_forward.1']
    %11 = vsyncpa [#allocation4], 0
    // Predicated region
    $region2: #{simple_classifier_forward.1} parent=1 // pred_check
      _
    $region3: #{simple_classifier_forward.1} parent=1 // pred_check_branch
      %13 = sbr.rel (0) target = $region5
    $region4: #{simple_classifier_forward.1} parent=1 // pred_region
      _
    $region5: #{simple_classifier_forward.1} parent=1 // pred_fallthru
      _
    // Predicated region
    $region6: #{simple_classifier_forward.1} parent=1 // pred_check
      _
    $region7: #{simple_classifier_forward.1} parent=1 // pred_check_branch
      %15 = sbr.rel (0) target = $region9
    $region8: #{simple_classifier_forward.1} parent=1 // pred_region
      _
    $region9: #{simple_classifier_forward.1} parent=1 // pred_fallthru
      _
    // Predicated region
    $region10: #{simple_classifier_forward.1} parent=1 // pred_check
      _
    $region11: #{simple_classifier_forward.1} parent=1 // pred_check_branch
      %17 = sbr.rel (0) target = $region13
    $region12: #{simple_classifier_forward.1} parent=1 // pred_region
      %s19 = ssub.s32 1024, 1024
      %20 = vsyncadd [#allocation4], %s19
      %s21 = sshll.u32 [#allocation3], 4
      %s22 = int_to_ptr.vmem [resolvable:$true] %s21
      %27 = dma.hbm_to_vmem [thread:$0]  %s2, 1024, %s22, [#allocation4], 128, 128, 8
    $region13: #{simple_classifier_forward.1} parent=1 // pred_fallthru
      _
    // Predicated region
    $region14: #{simple_classifier_forward.1} parent=1 // pred_check
      _
    $region15: #{simple_classifier_forward.1} parent=1 // pred_check_branch
      %29 = sbr.rel (0) target = $region17
    $region16: #{simple_classifier_forward.1} parent=1 // pred_region
      _
    $region17: #{simple_classifier_forward.1} parent=1 // pred_fallthru
      _
    // Predicated region
    $region18: #{simple_classifier_forward.1} parent=1 // pred_check
      _
    $region19: #{simple_classifier_forward.1} parent=1 // pred_check_branch
      %31 = sbr.rel (0) target = $region21
    $region20: #{simple_classifier_forward.1} parent=1 // pred_region
      _
    $region21: #{simple_classifier_forward.1} parent=1 // pred_fallthru
      _
    // Predicated region
    $region22: #{simple_classifier_forward.1} parent=1 // pred_check
      _
    $region23: #{simple_classifier_forward.1} parent=1 // pred_check_branch
      %33 = sbr.rel (0) target = $region25
    $region24: #{simple_classifier_forward.1} parent=1 // pred_region
      %34 = dma.done [#allocation4], 1024
    $region25: #{simple_classifier_forward.1} parent=1 // pred_fallthru
      _
    %v35 = vld [vmem:[%s3] sm:$0xff]
    %v36 = vld [vmem:[#allocation3] sm:$0xff]
    %v37 = vld [vmem:[#allocation3 + $0x8] sm:$0xff]
    %v38 = vld [vmem:[#allocation3 + $0x10] sm:$0xff]
    %v39 = vld [vmem:[#allocation3 + $0x18] sm:$0xff]
    %v40 = vld [vmem:[#allocation3 + $0x20] sm:$0xff]
    %v41 = vld [vmem:[#allocation3 + $0x28] sm:$0xff]
    %v42 = vld [vmem:[#allocation3 + $0x30] sm:$0xff]
    %v43 = vld [vmem:[#allocation3 + $0x38] sm:$0xff]
    %vm44 = vcmask 523264
    %v46 = vsel %vm44, %v35, 0
    %48 = vmatprep.subr.mxu0 0.0
    %49 = vmatpush1.msra.mxu0 %v36
    %50 = vmatprep.subr.mxu0 0.0
    %51 = vmatpush1.msra.mxu0 %v37
    %52 = vmatprep.subr.mxu0 0.0
    %53 = vmatpush1.msra.mxu0 %v38
    %54 = vmatprep.subr.mxu0 0.0
    %55 = vmatpush1.msra.mxu0 %v39
    %56 = vmatprep.subr.mxu0 0.0
    %57 = vmatpush1.msra.mxu0 %v40
    %58 = vmatprep.subr.mxu0 0.0
    %59 = vmatpush1.msra.mxu0 %v41
    %60 = vmatprep.subr.mxu0 0.0
    %61 = vmatpush1.msra.mxu0 %v42
    %62 = vmatprep.subr.mxu0 0.0
    %63 = vmatpush1.msra.mxu0 %v43
    %64 = vmatprep.subr.mxu0 0.0
    %65 = vmatpush1.msra.mxu0 0.0
    %66 = vmatprep.subr.mxu0 0.0
    %67 = vmatpush1.msra.mxu0 0.0
    %68 = vmatprep.subr.mxu0 0.0
    %69 = vmatpush1.msra.mxu0 0.0
    %70 = vmatprep.subr.mxu0 0.0
    %71 = vmatpush1.msra.mxu0 0.0
    %72 = vmatprep.subr.mxu0 0.0
    %73 = vmatpush1.msra.mxu0 0.0
    %74 = vmatprep.subr.mxu0 0.0
    %75 = vmatpush1.msra.mxu0 0.0
    %76 = vmatprep.subr.mxu0 0.0
    %77 = vmatpush1.msra.mxu0 0.0
    %78 = vmatprep.subr.mxu0 0.0
    %79 = vmatpush1.msra.mxu0 0.0
    %80 = vmatprep.subr.mxu0 0.0
    %81 = vmatpush1.msra.mxu0 0.0
    %82 = vmatprep.subr.mxu0 0.0
    %83 = vmatpush1.msra.mxu0 0.0
    %84 = vmatprep.subr.mxu0 0.0
    %85 = vmatpush1.msra.mxu0 0.0
    %86 = vmatprep.subr.mxu0 0.0
    %87 = vmatpush1.msra.mxu0 0.0
    %88 = vmatprep.subr.mxu0 0.0
    %89 = vmatpush1.msra.mxu0 0.0
    %90 = vmatprep.subr.mxu0 0.0
    %91 = vmatpush1.msra.mxu0 0.0
    %92 = vmatprep.subr.mxu0 0.0
    %93 = vmatpush1.msra.mxu0 0.0
    %94 = vmatprep.subr.mxu0 0.0
    %95 = vmatpush1.msra.mxu0 0.0
    %96 = vmatprep.subr.mxu0 0.0
    %97 = vmatpush1.msra.mxu0 0.0
    %98 = vmatprep.subr.mxu0 0.0
    %99 = vmatpush1.msra.mxu0 0.0
    %100 = vmatprep.subr.mxu0 0.0
    %101 = vmatpush1.msra.mxu0 0.0
    %102 = vmatprep.subr.mxu0 0.0
    %103 = vmatpush1.msra.mxu0 0.0
    %104 = vmatprep.subr.mxu0 0.0
    %105 = vmatpush1.msra.mxu0 0.0
    %106 = vmatprep.subr.mxu0 0.0
    %107 = vmatpush1.msra.mxu0 0.0
    %108 = vmatprep.subr.mxu0 0.0
    %109 = vmatpush1.msra.mxu0 0.0
    %110 = vmatprep.subr.mxu0 0.0
    %111 = vmatpush1.msra.mxu0 0.0
    %112 = vmatprep.mubr.f32.mxu0 0.0
    %113 = vmatmul.mubr.f32.gmra.mrb[0].mxu0 %v46
    %v114 = vpop.f32.mrb[0].mxu0
    %v115 = vadd.f32 0.0, %v114
    %v116 = vpop.f32.mrb[0].mxu0
    %117 = vdwg.mxu0
    %v118 = vld [vmem:[%s0] sm:$0xff]
    %v119 = vld [vmem:[%s1] sm:$0xff]
    %v120 = vcvt.s32.f32 %v119
    %v121 = vlaneseq
    %v122 = vand.u32 %v121, 127
    %123 = vset.pattern.permute.xlu0 0
    %124 = vperm.xlu0 %123, %v118
    %v125 = vpop.permute.xlu0 %124
    %vm126 = vcmp.eq.s32.totalorder %v122, %v125
    %v127 = vsel %vm126, %v115, 0.0
    %128 = vadd.xlane.f32.xlu0 %v127
    %v129 = vpop.xlane.xlu0 %128
    %v130 = vmul.f32 %v129, %v120
    %vm131 = vcmask 7168
    %v132 = vsel %vm131, %v130, 0.0
    %v133 = vrot.slane %v132, 4
    %v134 = vadd.f32 %v132, %v133
    %v135 = vrot.slane %v134, 2
    %v136 = vadd.f32 %v134, %v135
    %v137 = vrot.slane %v136, 1
    %v138 = vadd.f32 %v136, %v137
    %s139 = sld [smem:[#allocation2]]
    %v140 = vstv %s139
    %v141 = vadd.f32 %v138, %v140
    %v142 = vxor.u32 %v141, 2147483648
    %v143 = vmul.f32 %v142, 1.442695
    %v144 = vpow.pop %v143
    %v145 = vadd.f32 %v144, 1.0
    %v146 = vrcp.pop %v145
    %v147 = vmul.f32 1.0, %v146
    %vm148 = vcmp.eq.s32.totalorder %v122, 0
    %150 = vset.pattern.permute.xlu0 0
    %151 = vperm.xlu0 %150, %v147
    %v152 = vpop.permute.xlu0 %151
    %v154 = vsel %vm148, %v152, 0.0
    %155 = vset.pattern.permute.xlu0 1
    %156 = vperm.xlu0 %155, %v118
    %v157 = vpop.permute.xlu0 %156
    %vm158 = vcmp.eq.s32.totalorder %v122, %v157
    %v159 = vsel %vm158, %v115, 0.0
    %160 = vadd.xlane.f32.xlu0 %v159
    %v161 = vpop.xlane.xlu0 %160
    %v162 = vmul.f32 %v161, %v120
    %vm163 = vcmask 15368
    %v164 = vsel %vm163, %v162, 0.0
    %v165 = vrot.slane %v164, 4
    %v166 = vadd.f32 %v164, %v165
    %v167 = vrot.slane %v166, 2
    %v168 = vadd.f32 %v166, %v167
    %v169 = vrot.slane %v168, 1
    %v170 = vadd.f32 %v168, %v169
    %v171 = vadd.f32 %v170, %v140
    %v172 = vxor.u32 %v171, 2147483648
    %v173 = vmul.f32 %v172, 1.442695
    %v174 = vpow.pop %v173
    %v175 = vadd.f32 %v174, 1.0
    %v176 = vrcp.pop %v175
    %v177 = vmul.f32 1.0, %v176
    %vm178 = vcmp.eq.s32.totalorder %v122, 1
    %180 = vset.pattern.permute.xlu0 1
    %181 = vperm.xlu0 %180, %v177
    %v182 = vpop.permute.xlu0 %181
    %v184 = vsel %vm178, %v182, %v154
    %185 = vst [vmem:[%s5] sm:$0x1] %v184
    // Predicated region
    $region26: #{simple_classifier_forward.1} parent=1 // pred_check
      _
    $region27: #{simple_classifier_forward.1} parent=1 // pred_check_branch
      %187 = sbr.rel (0) target = $region29
    $region28: #{simple_classifier_forward.1} parent=1 // pred_region
      _
    $region29: #{simple_classifier_forward.1} parent=1 // pred_fallthru
      _
    // Predicated region
    $region30: #{simple_classifier_forward.1} parent=1 // pred_check
      _
    $region31: #{simple_classifier_forward.1} parent=1 // pred_check_branch
      %189 = sbr.rel (0) target = $region33
    $region32: #{simple_classifier_forward.1} parent=1 // pred_region
      _
    $region33: #{simple_classifier_forward.1} parent=1 // pred_fallthru
      _
    %190 = vsyncpa [#allocation4], 1

</llo_original>
